<compile_context>
chip_gen: v6e
topology: v6e:2x2x1
jax: 0.10.0
libtpu: 0.0.40
codegen_flags: <defaults>
</compile_context>

<pallas_src>
import jax
import jax.numpy as jnp
from jax.experimental import pallas as pl
from jax.experimental.pallas import tpu as pltpu

EPS0 = 1e-5   # nn.InstanceNorm2d default eps (first norm, affine=True)
EPS1 = 0.01   # second norm eps (affine=False)


def _make_kernel(hw_true: int, hw_pad: int):
    """Build the fused double-instance-norm kernel for a given spatial size."""
    needs_mask = hw_pad != hw_true
    inv_hw = 1.0 / float(hw_true)

    def kernel(x_ref, g_ref, o_ref):
        # x_ref: (1, TC, HW_pad); g_ref: (TC, 1); o_ref: (1, TC, HW_pad)
        x = x_ref[0].astype(jnp.float32)          # (TC, HW_pad)
        g = g_ref[...].astype(jnp.float32)        # (TC, 1)

        # First pass statistics (padded lanes are zero, divide by true HW).
        mean0 = jnp.sum(x, axis=1, keepdims=True) * inv_hw
        xc = x - mean0                             # centered, reused everywhere
        if needs_mask:
            lane = jax.lax.broadcasted_iota(jnp.int32, x.shape, 1)
            xc_red = jnp.where(lane < hw_true, xc, 0.0)
        else:
            xc_red = xc
        var0 = jnp.sum(xc_red * xc_red, axis=1, keepdims=True) * inv_hw

        # Fused second norm: per-row scale only (beta cancels exactly).
        inv_std0 = jax.lax.rsqrt(var0 + EPS0)
        var1 = (g * g) * var0 * (inv_std0 * inv_std0)   # g^2 * var0/(var0+eps0)
        scale = g * inv_std0 * jax.lax.rsqrt(var1 + EPS1)

        o_ref[0] = (xc * scale).astype(o_ref.dtype)

    return kernel


def _pick_channel_tile(C: int, hw_pad: int, bytes_per_elt: int = 4,
                       target_bytes: int = 2 << 20) -> int:
    """Largest channel tile that keeps a block ~<= target_bytes and respects
    the (8,128) tiling rule (tile == C, or a multiple-of-8 divisor of C)."""
    max_rows = max(1, target_bytes // (hw_pad * bytes_per_elt))
    if C <= max_rows:
        return C
    for d in range(min(C, max_rows), 0, -1):
        if C % d == 0 and d % 8 == 0:
            return d
    return C  # fallback: single full-channel block


def instance_norm_model(x, gamma, beta):
    """Equivalent of Model.forward(x) for x of shape (N, C, H, W)."""
    del beta  # cancels exactly in the fused second (affine=False) norm
    N, C, H, W = x.shape
    HW = H * W
    HW_pad = ((HW + 127) // 128) * 128            # lane axis multiple of 128

    x3d = x.reshape(N, C, HW)
    if HW_pad != HW:
        x3d = jnp.pad(x3d, ((0, 0), (0, 0), (0, HW_pad - HW)))

    g2d = gamma.reshape(C, 1).astype(jnp.float32)  # no N-fold tiling in HBM

    TC = _pick_channel_tile(C, HW_pad)
    grid = (N, C // TC)

    out3d = pl.pallas_call(
        _make_kernel(HW, HW_pad),
        out_shape=jax.ShapeDtypeStruct((N, C, HW_pad), x.dtype),
        grid_spec=pltpu.PrefetchScalarGridSpec(
            num_scalar_prefetch=0,
            grid=grid,
            in_specs=[
                pl.BlockSpec((1, TC, HW_pad), lambda n, c: (n, c, 0)),
                pl.BlockSpec((TC, 1), lambda n, c: (c, 0)),
            ],
            out_specs=pl.BlockSpec((1, TC, HW_pad), lambda n, c: (n, c, 0)),
        ),
        compiler_params=pltpu.CompilerParams(
            dimension_semantics=("parallel", "parallel")),
    )(x3d, g2d)

    if HW_pad != HW:
        out3d = out3d[:, :, :HW]
    return out3d.reshape(N, C, H, W)


def reference(x, gamma, beta):
    """Pure-JAX literal two-pass reference for checking."""
    mean0 = jnp.mean(x, axis=(2, 3), keepdims=True)
    var0 = jnp.mean((x - mean0) ** 2, axis=(2, 3), keepdims=True)
    y = (x - mean0) * jax.lax.rsqrt(var0 + EPS0)
    y = y * gamma.reshape(1, -1, 1, 1) + beta.reshape(1, -1, 1, 1)
    mean1 = jnp.mean(y, axis=(2, 3), keepdims=True)
    var1 = jnp.mean((y - mean1) ** 2, axis=(2, 3), keepdims=True)
    return (y - mean1) * jax.lax.rsqrt(var1 + EPS1)


if __name__ == "__main__":
    key = jax.random.PRNGKey(0)
    kx, kg, kb, kx2 = jax.random.split(key, 4)

    N, C = 2, 12  # num_features=12 as in the module
    # torch.rand(12) -> uniform [0, 1)
    gamma = jax.random.uniform(kg, (C,), dtype=jnp.float32)
    beta = jax.random.uniform(kb, (C,), dtype=jnp.float32)

    run = jax.jit(instance_norm_model)

    # Case 1: H*W already a multiple of 128.
    x = jax.random.normal(kx, (N, C, 16, 16), dtype=jnp.float32)
    out = jax.block_until_ready(run(x, gamma, beta))
    ref = reference(x, gamma, beta)
    assert out.shape == x.shape
    assert jnp.allclose(out, ref, atol=1e-4, rtol=1e-4)

    # Case 2: H*W not a multiple of 128 (exercises lane padding + masking).
    x2 = jax.random.normal(kx2, (N, C, 14, 14), dtype=jnp.float32)
    out2 = jax.block_until_ready(run(x2, gamma, beta))
    ref2 = reference(x2, gamma, beta)
    assert out2.shape == x2.shape
    assert jnp.allclose(out2, ref2, atol=1e-4, rtol=1e-4)

    print("KERNEL_OK")
</pallas_src>

<mosaic_0001>
module attributes {stable_mosaic.version = 11 : i64} {
  func.func @kernel(%arg0: i32, %arg1: i32, %arg2: memref<1x12x256xf32, #tpu.memory_space<vmem>>, %arg3: memref<12x1xf32, #tpu.memory_space<vmem>>, %arg4: memref<1x12x256xf32, #tpu.memory_space<vmem>>) attributes {dimension_semantics = [#tpu.dimension_semantics<parallel>, #tpu.dimension_semantics<parallel>], iteration_bounds = array<i64: 2, 1>, scalar_prefetch = 0 : i64, scratch_operands = 0 : i64, tpu.core_type = #tpu.core_type<tc>, window_params = [{transform_indices = @transform_0, window_bounds = array<i64: 1, 12, 256>}, {transform_indices = @transform_1, window_bounds = array<i64: 12, 1>}, {transform_indices = @transform_2, window_bounds = array<i64: 1, 12, 256>}]} {
    %c0 = arith.constant 0 : index
    %c0_0 = arith.constant 0 : index
    %c0_1 = arith.constant 0 : index
    %0 = vector.load %arg2[%c0, %c0_0, %c0_1] : memref<1x12x256xf32, #tpu.memory_space<vmem>>, vector<1x12x256xf32>
    %1 = vector.shape_cast %0 : vector<1x12x256xf32> to vector<12x256xf32>
    %c0_2 = arith.constant 0 : index
    %c0_3 = arith.constant 0 : index
    %2 = vector.load %arg3[%c0_2, %c0_3] : memref<12x1xf32, #tpu.memory_space<vmem>>, vector<12x1xf32>
    %cst = arith.constant dense<0.000000e+00> : vector<12xf32>
    %3 = vector.multi_reduction <add>, %1, %cst [1] : vector<12x256xf32> to vector<12xf32>
    %4 = vector.shape_cast %3 : vector<12xf32> to vector<12x1xf32>
    %cst_4 = arith.constant 3.906250e-03 : f32
    %5 = vector.broadcast %cst_4 : f32 to vector<12x1xf32>
    %6 = arith.mulf %4, %5 : vector<12x1xf32>
    %7 = vector.broadcast %6 : vector<12x1xf32> to vector<12x256xf32>
    %8 = arith.subf %1, %7 : vector<12x256xf32>
    %9 = arith.mulf %8, %8 : vector<12x256xf32>
    %cst_5 = arith.constant dense<0.000000e+00> : vector<12xf32>
    %10 = vector.multi_reduction <add>, %9, %cst_5 [1] : vector<12x256xf32> to vector<12xf32>
    %11 = vector.shape_cast %10 : vector<12xf32> to vector<12x1xf32>
    %cst_6 = arith.constant 3.906250e-03 : f32
    %12 = vector.broadcast %cst_6 : f32 to vector<12x1xf32>
    %13 = arith.mulf %11, %12 : vector<12x1xf32>
    %cst_7 = arith.constant 9.99999974E-6 : f32
    %14 = vector.broadcast %cst_7 : f32 to vector<12x1xf32>
    %15 = arith.addf %13, %14 : vector<12x1xf32>
    %16 = math.rsqrt %15 : vector<12x1xf32>
    %17 = arith.mulf %2, %2 : vector<12x1xf32>
    %18 = arith.mulf %17, %13 : vector<12x1xf32>
    %19 = arith.mulf %16, %16 : vector<12x1xf32>
    %20 = arith.mulf %18, %19 : vector<12x1xf32>
    %21 = arith.mulf %2, %16 : vector<12x1xf32>
    %cst_8 = arith.constant 0.00999999977 : f32
    %22 = vector.broadcast %cst_8 : f32 to vector<12x1xf32>
    %23 = arith.addf %20, %22 : vector<12x1xf32>
    %24 = math.rsqrt %23 : vector<12x1xf32>
    %25 = arith.mulf %21, %24 : vector<12x1xf32>
    %26 = vector.broadcast %25 : vector<12x1xf32> to vector<12x256xf32>
    %27 = arith.mulf %8, %26 : vector<12x256xf32>
    %c0_9 = arith.constant 0 : index
    %c0_10 = arith.constant 0 : index
    %c0_11 = arith.constant 0 : index
    %28 = vector.load %arg4[%c0_9, %c0_10, %c0_11] : memref<1x12x256xf32, #tpu.memory_space<vmem>>, vector<1x12x256xf32>
    %29 = vector.shape_cast %28 : vector<1x12x256xf32> to vector<12x256xf32>
    %30 = vector.shape_cast %27 : vector<12x256xf32> to vector<1x12x256xf32>
    tpu.vector_store %arg4[%c0_9, %c0_10, %c0_11], %30 {strides = array<i32>} : memref<1x12x256xf32, #tpu.memory_space<vmem>>, vector<1x12x256xf32>,
    return
  }
  func.func @transform_0(%arg0: i32, %arg1: i32) -> (i32, i32, i32) {
    %c0_i32 = arith.constant 0 : i32
    %c0_i32_0 = arith.constant 0 : i32
    return %arg0, %arg1, %c0_i32 : i32, i32, i32
  }
  func.func @transform_1(%arg0: i32, %arg1: i32) -> (i32, i32) {
    %c0_i32 = arith.constant 0 : i32
    %c0_i32_0 = arith.constant 0 : i32
    return %arg1, %c0_i32 : i32, i32
  }
  func.func @transform_2(%arg0: i32, %arg1: i32) -> (i32, i32, i32) {
    %c0_i32 = arith.constant 0 : i32
    %c0_i32_0 = arith.constant 0 : i32
    return %arg0, %arg1, %c0_i32 : i32, i32, i32
  }
}

</mosaic_0001>

<llo_original>
// kernel: instance_norm_model.1
$region0: #{instance_norm_model.1}
  #allocation0 [shape = 'u32[]', space=smem, size = 0x4, offset = 0x4, fixed_abs, tag = 'smem constant byte address 0x4 - core index']
  #allocation1 [shape = 'u32[144,128]{1,0:T(1,128)}', space=vmem, size = 0x12000, scoped, tag = 'internal scratch']
  %s0 = inlined_call_operand.vmem [shape: f32[2,12,256], index: 0, kind: input, shape index: {}]
  %s1 = inlined_call_operand.vmem [shape: f32[12,1], index: 1, kind: input, shape index: {}]
  %s2 = inlined_call_operand.vmem [shape: f32[2,12,256], index: 2, kind: output, shape index: {}]
  %s3 = sld [smem:[#allocation0]]
  $region41: #{instance_norm_model.1} parent=0
    _
  %s5 = ssub.s32 1, %s3
  %s6 = scalar_select 0, %s5, %s3
  loop: start=0, step=1, limit=4
  $region2: #{instance_norm_model.1} parent=0 // loop_pre_header
    _
  $region3: #{instance_norm_model.1} parent=0 // loop_header
    %s8 = sphi 0, %s12
    %p9 = scmp.ge.s32.totalorder %s8, 4
    %s15 = sphi 0, %s27
    %s16 = sphi 0, %s23
    %s17 = sphi 0, %s15
    %s18 = sphi 0, %s16
    %s19 = sphi 0, %s17
    %s20 = sphi 0, %s18
    %s32 = sphi 0, %s34
    %s35 = sphi 0, %s32
    %s36 = sphi 0, %s35
    %s52 = sphi 0, %s36
    %s58 = sphi 0, %s60
    %s61 = sphi 0, %s58
    %s62 = sphi 0, %s61
    %s78 = sphi 0, %s62
    %s86 = sphi 0, %s88
    %s89 = sphi 0, %s86
    %s90 = sphi 0, %s89
    %s106 = sphi 0, %s90
  $region4: #{instance_norm_model.1} parent=0 // loop_header_branch
    %11 = sbr.rel (%p9) target = $region8
  $region5: #{instance_norm_model.1} parent=0 // loop_body
    %s13 = ssub.s32 %s8, 1
    %s14 = ssub.s32 %s8, 2
    %s21 = sadd.s32 1, %s16
    %p22 = scmp.ge.s32.totalorder %s21, 1
    %s23 = scalar_select %p22, 0, %s21
    %s24 = sadd.s32 1, %s15
    %s25 = scalar_select %p22, %s24, %s15
    %p26 = scmp.ge.s32.totalorder %s25, 2
    %s27 = scalar_select %p26, 0, %s25
    %s28 = ssub.s32 %s15, %s27
    %s29 = ssub.s32 %s16, %s23
    %s30 = sor.u32 %s28, %s29
    %p31 = scmp.eq.s32.totalorder %s30, 0
    %s33 = sadd.s32 %s32, 1
    %s34 = scalar_select %p31, %s32, %s33
    %p37 = pneg %p31
    %p38 = scmp.eq.s32.totalorder %s8, 1
    %p39 = por %p37, %p38
    %p40 = scmp.ne.s32.totalorder %s32, %s35
    %p41 = scmp.eq.s32.totalorder %s8, 0
    %p42 = por %p40, %p41
    %p43 = scmp.ne.s32.totalorder %s32, %s35
    %p44 = scmp.eq.s32.totalorder %s13, 1
    %p45 = por %p43, %p44
    %p46 = scmp.ne.s32.totalorder %s35, %s36
    %p47 = scmp.eq.s32.totalorder %s13, 0
    %p48 = por %p46, %p47
    %p49 = scmp.ne.s32.totalorder %s35, %s36
    %p50 = scmp.eq.s32.totalorder %s14, 1
    %p51 = por %p49, %p50
    %p53 = scmp.ne.s32.totalorder %s36, %s52
    %p54 = scmp.eq.s32.totalorder %s14, 0
    %p55 = por %p53, %p54
    %s56 = ssub.s32 %s16, %s23
    %p57 = scmp.eq.s32.totalorder %s56, 0
    %s59 = sadd.s32 %s58, 1
    %s60 = scalar_select %p57, %s58, %s59
    %p63 = pneg %p57
    %p64 = scmp.eq.s32.totalorder %s8, 1
    %p65 = por %p63, %p64
    %p66 = scmp.ne.s32.totalorder %s58, %s61
    %p67 = scmp.eq.s32.totalorder %s8, 0
    %p68 = por %p66, %p67
    %p69 = scmp.ne.s32.totalorder %s58, %s61
    %p70 = scmp.eq.s32.totalorder %s13, 1
    %p71 = por %p69, %p70
    %p72 = scmp.ne.s32.totalorder %s61, %s62
    %p73 = scmp.eq.s32.totalorder %s13, 0
    %p74 = por %p72, %p73
    %p75 = scmp.ne.s32.totalorder %s61, %s62
    %p76 = scmp.eq.s32.totalorder %s14, 1
    %p77 = por %p75, %p76
    %p79 = scmp.ne.s32.totalorder %s62, %s78
    %p80 = scmp.eq.s32.totalorder %s14, 0
    %p81 = por %p79, %p80
    %s82 = ssub.s32 %s15, %s27
    %s83 = ssub.s32 %s16, %s23
    %s84 = sor.u32 %s82, %s83
    %p85 = scmp.eq.s32.totalorder %s84, 0
    %s87 = sadd.s32 %s86, 1
    %s88 = scalar_select %p85, %s86, %s87
    %p91 = pneg %p85
    %p92 = scmp.eq.s32.totalorder %s8, 1
    %p93 = por %p91, %p92
    %p94 = scmp.ne.s32.totalorder %s86, %s89
    %p95 = scmp.eq.s32.totalorder %s8, 0
    %p96 = por %p94, %p95
    %p97 = scmp.ne.s32.totalorder %s86, %s89
    %p98 = scmp.eq.s32.totalorder %s13, 1
    %p99 = por %p97, %p98
    %p100 = scmp.ne.s32.totalorder %s89, %s90
    %p101 = scmp.eq.s32.totalorder %s13, 0
    %p102 = por %p100, %p101
    %p103 = scmp.ne.s32.totalorder %s89, %s90
    %p104 = scmp.eq.s32.totalorder %s14, 1
    %p105 = por %p103, %p104
    %p107 = scmp.ne.s32.totalorder %s90, %s106
    %p108 = scmp.eq.s32.totalorder %s14, 0
    %p109 = por %p107, %p108
    %p110 = scmp.le.s32.totalorder 1, %s8
    %p111 = scmp.lt.s32.totalorder %s8, 3
    %p112 = pnand %p110, %p111
    %p113 = pneg %p112
    // Predicated region
    $region9: #{instance_norm_model.1} parent=5 // pred_check
      _
    $region10: #{instance_norm_model.1} parent=5 // pred_check_branch
      %115 = sbr.rel (%p112) target = $region12
    $region11: #{instance_norm_model.1} parent=5 // pred_region
      %s116 = ssub.s32 %s8, 1
      // Predicated region
      $region13: #{instance_norm_model.1} parent=11 // pred_check
        %p117 = pneg %p74
      $region14: #{instance_norm_model.1} parent=11 // pred_check_branch
        %119 = sbr.rel (%p117) target = $region16
      $region15: #{instance_norm_model.1} parent=11 // pred_region
        %s120 = smul.u32 2, %s18
        %p121 = scmp.lt.s32.totalorder %s120, 1
        %s122 = scalar_select %p121, %s120, 1
        %s123 = smul.addr %s122, 8
        %s124 = scalar_lea.vmem %s1, %s123
        %s125 = smul.u32 2, %s18
      $region16: #{instance_norm_model.1} parent=11 // pred_fallthru
        _
    $region12: #{instance_norm_model.1} parent=5 // pred_fallthru
      _
    %p126 = scmp.lt.s32.totalorder %s8, 2
    // Predicated region
    $region17: #{instance_norm_model.1} parent=5 // pred_check
      %p127 = pneg %p126
    $region18: #{instance_norm_model.1} parent=5 // pred_check_branch
      %129 = sbr.rel (%p127) target = $region20
    $region19: #{instance_norm_model.1} parent=5 // pred_region
      // Predicated region
      $region21: #{instance_norm_model.1} parent=19 // pred_check
        %p130 = pneg %p42
      $region22: #{instance_norm_model.1} parent=19 // pred_check_branch
        %132 = sbr.rel (%p130) target = $region24
      $region23: #{instance_norm_model.1} parent=19 // pred_region
        %s133 = smul.u32 2, %s16
        %p134 = scmp.lt.s32.totalorder %s15, 1
        %s135 = scalar_select %p134, %s15, 1
        %p136 = scmp.lt.s32.totalorder %s133, 1
        %s137 = scalar_select %p136, %s133, 1
        %s138 = smul.addr %s137, 2
        %s139 = smul.addr %s135, 4
        %s140 = sadd.s32 %s138, %s139
        %s141 = smul.addr %s140, 8
        %s142 = scalar_lea.vmem %s0, %s141
        %s143 = smul.u32 2, %s16
      $region24: #{instance_norm_model.1} parent=19 // pred_fallthru
        _
    $region20: #{instance_norm_model.1} parent=5 // pred_fallthru
      _
    %p144 = scmp.le.s32.totalorder 1, %s8
    %p145 = scmp.lt.s32.totalorder %s8, 3
    %p146 = pnand %p144, %p145
    %p147 = pneg %p146
    // Predicated region
    $region25: #{instance_norm_model.1} parent=5 // pred_check
      _
    $region26: #{instance_norm_model.1} parent=5 // pred_check_branch
      %149 = sbr.rel (%p146) target = $region28
    $region27: #{instance_norm_model.1} parent=5 // pred_region
      %s150 = ssub.s32 %s8, 1
      %s151 = smul.u32 2, %s18
      %p152 = scmp.lt.s32.totalorder %s17, 1
      %s153 = scalar_select %p152, %s17, 1
      %p154 = scmp.lt.s32.totalorder %s151, 1
      %s155 = scalar_select %p154, %s151, 1
      %s156 = smul.addr %s155, 2
      %s157 = smul.addr %s153, 4
      %s158 = sadd.s32 %s156, %s157
      %s159 = smul.addr %s158, 8
      %s160 = scalar_lea.vmem %s0, %s159
      %p161 = pneg %p48
      %p162 = pneg %p45
      %s163 = smul.u32 2, %s18
      %p164 = scmp.lt.s32.totalorder %s163, 1
      %s165 = scalar_select %p164, %s163, 1
      %s166 = smul.addr %s165, 8
      %s167 = scalar_lea.vmem %s1, %s166
      %p168 = pneg %p74
      %p169 = pneg %p71
      %p170 = pneg %p102
      %p171 = pneg %p99
      %s172 = smul.u32 2, %s18
      %p173 = scmp.lt.s32.totalorder %s17, 1
      %s174 = scalar_select %p173, %s17, 1
      %p175 = scmp.lt.s32.totalorder %s172, 1
      %s176 = scalar_select %p175, %s172, 1
      %s177 = smul.addr %s176, 2
      %s178 = smul.addr %s174, 4
      %s179 = sadd.s32 %s177, %s178
      %s180 = smul.addr %s179, 8
      %s181 = scalar_lea.vmem %s2, %s180
      %s182 = smul.u32 2, %s18
      %p183 = scmp.lt.s32.totalorder %s17, 1
      %s184 = scalar_select %p183, %s17, 1
      %p185 = scmp.lt.s32.totalorder %s182, 1
      %s186 = scalar_select %p185, %s182, 1
      %s187 = smul.addr %s186, 2
      %s188 = smul.addr %s184, 4
      %s189 = sadd.s32 %s187, %s188
      %s190 = smul.addr %s189, 8
      %s191 = scalar_lea.vmem %s0, %s190
      %s192 = smul.u32 2, %s18
      %s193 = smul.u32 2, %s18
      %p194 = scmp.lt.s32.totalorder %s193, 1
      %s195 = scalar_select %p194, %s193, 1
      %s196 = smul.addr %s195, 8
      %s197 = scalar_lea.vmem %s1, %s196
      %s198 = smul.u32 2, %s18
      %s199 = smul.u32 2, %s18
      %p200 = scmp.lt.s32.totalorder %s17, 1
      %s201 = scalar_select %p200, %s17, 1
      %p202 = scmp.lt.s32.totalorder %s199, 1
      %s203 = scalar_select %p202, %s199, 1
      %s204 = smul.addr %s203, 2
      %s205 = smul.addr %s201, 4
      %s206 = sadd.s32 %s204, %s205
      %s207 = smul.addr %s206, 8
      %s208 = scalar_lea.vmem %s2, %s207
      %s209 = smul.u32 2, %s18
      %v210 = vld [vmem:[%s191] sm:$0xff]
      %v211 = vld [vmem:[%s191 + $0x8] sm:$0xff]
      %v212 = vld [vmem:[%s191 + $0x10] sm:$0xf]
      %v213 = vld [vmem:[%s191 + $0x18] sm:$0xf]
      %v214 = vld [vmem:[%s197] sm:$0xff]
      %v215 = vld [vmem:[%s197 + $0x8] sm:$0xf]
      %v216 = vadd.f32 %v210, %v211
      %217 = vadd.xlane.f32.xlu0 %v216
      %v218 = vpop.xlane.xlu0 %217
      %vm219 = vcmask 1043456
      %v220 = vsel %vm219, %v212, 0.0
      %v221 = vsel %vm219, %v213, 0.0
      %v222 = vadd.f32 %v220, %v221
      %223 = vadd.xlane.f32.xlu0 %v222
      %v224 = vpop.xlane.xlu0 %223
      %v225 = vmul.f32 %v218, 0.00390625
      %v226 = vmul.f32 %v224, 0.00390625
      %v227 = vsub.f32 %v210, %v225
      %v228 = vsub.f32 %v211, %v225
      %v229 = vsub.f32 %v212, %v226
      %v230 = vsub.f32 %v213, %v226
      %v231 = vmul.f32 %v227, %v227
      %v232 = vmul.f32 %v228, %v228
      %v233 = vmul.f32 %v229, %v229
      %v234 = vmul.f32 %v230, %v230
      %v235 = vadd.f32 %v231, %v232
      %236 = vadd.xlane.f32.xlu0 %v235
      %v237 = vpop.xlane.xlu0 %236
      %v238 = vsel %vm219, %v233, 0.0
      %v239 = vsel %vm219, %v234, 0.0
      %v240 = vadd.f32 %v238, %v239
      %241 = vadd.xlane.f32.xlu0 %v240
      %v242 = vpop.xlane.xlu0 %241
      %v243 = vmul.f32 %v237, 0.00390625
      %v244 = vmul.f32 %v242, 0.00390625
      %v245 = vadd.f32 %v243, 1e-05
      %v246 = vadd.f32 %v244, 1e-05
      %v247 = vrsqrt.pop %v245
      %v248 = vrsqrt.pop %v246
      %v249 = vmul.f32 %v214, %v214
      %v250 = vmul.f32 %v215, %v215
      %v251 = vmul.f32 %v249, %v243
      %v252 = vmul.f32 %v250, %v244
      %v253 = vmul.f32 %v247, %v247
      %v254 = vmul.f32 %v248, %v248
      %v255 = vmul.f32 %v251, %v253
      %v256 = vmul.f32 %v252, %v254
      %v257 = vmul.f32 %v214, %v247
      %v258 = vmul.f32 %v215, %v248
      %v259 = vadd.f32 %v255, 0.01
      %v260 = vadd.f32 %v256, 0.01
      %v261 = vrsqrt.pop %v259
      %v262 = vrsqrt.pop %v260
      %v263 = vmul.f32 %v257, %v261
      %v264 = vmul.f32 %v258, %v262
      %266 = vset.pattern.permute.xlu0 0
      %267 = vperm.xlu0 %266, %v263
      %v268 = vpop.permute.xlu0 %267
      %271 = vset.pattern.permute.xlu0 0
      %272 = vperm.xlu0 %271, %v264
      %v273 = vpop.permute.xlu0 %272
      %v275 = vmul.f32 %v227, %v268
      %v276 = vmul.f32 %v228, %v268
      %v277 = vmul.f32 %v229, %v273
      %v278 = vmul.f32 %v230, %v273
      %279 = vst [vmem:[%s208] sm:$0xff] %v275
      %280 = vst [vmem:[%s208 + $0x8] sm:$0xff] %v276
      %281 = vst [vmem:[%s208 + $0x10] sm:$0xf] %v277
      %282 = vst [vmem:[%s208 + $0x18] sm:$0xf] %v278
      %s283 = smul.u32 2, %s18
      %p284 = scmp.lt.s32.totalorder %s17, 1
      %s285 = scalar_select %p284, %s17, 1
      %p286 = scmp.lt.s32.totalorder %s283, 1
      %s287 = scalar_select %p286, %s283, 1
      %s288 = smul.addr %s287, 2
      %s289 = smul.addr %s285, 4
      %s290 = sadd.s32 %s288, %s289
      %s291 = smul.addr %s290, 8
      %s292 = scalar_lea.vmem %s2, %s291
      // Predicated region
      $region29: #{instance_norm_model.1} parent=27 // pred_check
        %p293 = pneg %p99
      $region30: #{instance_norm_model.1} parent=27 // pred_check_branch
        %295 = sbr.rel (%p293) target = $region32
      $region31: #{instance_norm_model.1} parent=27 // pred_region
        %s296 = smul.u32 2, %s18
      $region32: #{instance_norm_model.1} parent=27 // pred_fallthru
        _
    $region28: #{instance_norm_model.1} parent=5 // pred_fallthru
      _
    %p297 = scmp.le.s32.totalorder 2, %s8
    // Predicated region
    $region33: #{instance_norm_model.1} parent=5 // pred_check
      %p298 = pneg %p297
    $region34: #{instance_norm_model.1} parent=5 // pred_check_branch
      %300 = sbr.rel (%p298) target = $region36
    $region35: #{instance_norm_model.1} parent=5 // pred_region
      %s301 = ssub.s32 %s8, 2
      // Predicated region
      $region37: #{instance_norm_model.1} parent=35 // pred_check
        %p302 = pneg %p105
      $region38: #{instance_norm_model.1} parent=35 // pred_check_branch
        %304 = sbr.rel (%p302) target = $region40
      $region39: #{instance_norm_model.1} parent=35 // pred_region
        %s305 = smul.u32 2, %s20
        %p306 = scmp.lt.s32.totalorder %s19, 1
        %s307 = scalar_select %p306, %s19, 1
        %p308 = scmp.lt.s32.totalorder %s305, 1
        %s309 = scalar_select %p308, %s305, 1
        %s310 = smul.addr %s309, 2
        %s311 = smul.addr %s307, 4
        %s312 = sadd.s32 %s310, %s311
        %s313 = smul.addr %s312, 8
        %s314 = scalar_lea.vmem %s2, %s313
      $region40: #{instance_norm_model.1} parent=35 // pred_fallthru
        _
    $region36: #{instance_norm_model.1} parent=5 // pred_fallthru
      _
  $region6: #{instance_norm_model.1} parent=0 // loop_footer
    %s12 = sadd.s32 1, %s8
  $region7: #{instance_norm_model.1} parent=0 // loop_footer_branch
    %7 = sbr.rel target = $region3
  $region8: #{instance_norm_model.1} parent=0 // loop_exit
    _

</llo_original>
